<compile_context>
chip_gen: v7x
topology: tpu7x:2x2x1
jax: 0.10.0
libtpu: 0.0.40
codegen_flags: <defaults>
</compile_context>

<pallas_src>
import jax
import jax.numpy as jnp
from jax.experimental import pallas as pl
from jax.experimental.pallas import tpu as pltpu


# Below this many elements the pallas_call dispatch cost dwarfs the math -> plain XLA.
_PALLAS_MIN_ELEMS = 4096


def _fused_permute_linear_kernel(x_ref, w_ref, b_ref, o_ref):
    """out[b, i, j] = sum_k x[b, k, i] * w[j, k] + bias[j]   (permute + linear, fused).

    x_ref: VMEM (tb, S, S) laid out as [b, k, i]
    w_ref: VMEM (S, S)     laid out as [j, k]     (f32)
    b_ref: VMEM (1, S)     laid out as [., j]     (f32)
    o_ref: VMEM (tb, S, S) laid out as [b, i, j]  (the already-permuted layout)
    """
    tb, S, _ = x_ref.shape

    # Single hoisted load + single upcast of the whole tile (review #3 / #8).
    x = x_ref[...].astype(jnp.float32)                                  # (tb, S_k, S_i)
    w = jnp.broadcast_to(w_ref[...].astype(jnp.float32)[None, :, :],
                         (tb, S, S))                                    # (tb, S_j, S_k)

    # Canonical batched matmul on the MXU: y[b, j, i] = sum_k w[j, k] * x[b, k, i].
    y = jnp.einsum("bjk,bki->bji", w, x, preferred_element_type=jnp.float32)

    # Fold the (0, 2, 1) permute in-kernel (review #2) and add the bias along j (lanes).
    out = jnp.swapaxes(y, 1, 2) + b_ref[...].astype(jnp.float32)[None, :, :]

    o_ref[...] = out.astype(o_ref.dtype)


def _pick_batch_tile(b, cap=256):
    """Largest divisor of b that is <= cap (keeps double-buffered tiles tiny vs VMEM,
    including the 64 MiB budget on v7x)."""
    t = min(b, cap)
    while b % t:
        t -= 1
    return t


def permute_linear(x, w, bias, *, force_pallas=False, batch_tile=None):
    """x.permute(0, 2, 1) @ w.T + bias for x of shape (B, S, S)."""
    B, S, S2 = x.shape
    assert S == S2 and w.shape == (S, S) and bias.shape == (S,)

    # (#1) Tiny-shape fallback: launch overhead >> 8 FMAs at the spec shape.
    if not force_pallas and x.size < _PALLAS_MIN_ELEMS:
        out = (jnp.einsum("bki,jk->bij",
                          x.astype(jnp.float32), w.astype(jnp.float32))
               + bias.astype(jnp.float32)[None, None, :])
        return out.astype(x.dtype)

    tb = batch_tile if batch_tile is not None else _pick_batch_tile(B)
    assert B % tb == 0, "batch tile must divide B"
    grid = (B // tb,)

    w32 = w.astype(jnp.float32)
    b32 = bias.astype(jnp.float32).reshape(1, S)

    return pl.pallas_call(
        _fused_permute_linear_kernel,
        out_shape=jax.ShapeDtypeStruct((B, S, S), x.dtype),
        grid_spec=pltpu.PrefetchScalarGridSpec(
            num_scalar_prefetch=0,
            grid=grid,
            in_specs=[
                pl.BlockSpec((tb, S, S), lambda i: (i, 0, 0)),   # x, tiled over batch
                pl.BlockSpec((S, S), lambda i: (0, 0)),          # weight (full, resident)
                pl.BlockSpec((1, S), lambda i: (0, 0)),          # bias (full, resident)
            ],
            out_specs=pl.BlockSpec((tb, S, S), lambda i: (i, 0, 0)),
        ),
        compiler_params=pltpu.CompilerParams(
            dimension_semantics=("parallel",)),                  # (#6) megacore over batch
    )(x, w32, b32)


def model_forward(x1, bias, **kwargs):
    """Mirrors Model.forward: the weight is the fixed 2x2 swap matrix set inside forward().

    The layer_norm(x1) of the reference never feeds the output, so it is omitted; its only
    role (dtype/device of the weight cast) is covered by casting params/output to x1.dtype.
    """
    S = x1.shape[-1]
    assert S == 2, "the reference forward() hard-codes a 2x2 weight"
    w = jnp.array([[0.0, 1.0], [1.0, 0.0]], dtype=x1.dtype)
    return permute_linear(x1, w, bias.astype(x1.dtype), **kwargs)


if __name__ == "__main__":
    key = jax.random.PRNGKey(0)
    kx, kb, kx2 = jax.random.split(key, 3)

    # Matches the torch spec: x1 = torch.randn(1, 2, 2)
    B, S = 1, 2
    x1 = jax.random.normal(kx, (B, S, S), dtype=jnp.float32)

    # Bias keeps the nn.Linear(2, 2) default init: U(-1/sqrt(in_f), 1/sqrt(in_f)).
    bound = 1.0 / (float(S) ** 0.5)
    bias = jax.random.uniform(kb, (S,), minval=-bound, maxval=bound, dtype=jnp.float32)

    w = jnp.array([[0.0, 1.0], [1.0, 0.0]], dtype=jnp.float32)

    def ref_fn(x, b):
        return jnp.transpose(x, (0, 2, 1)) @ w.T + b[None, None, :]

    # 1) Spec shape through the public entry point (takes the tiny-shape jnp fallback).
    out_fb = jax.block_until_ready(model_forward(x1, bias))
    assert out_fb.shape == (B, S, S)
    assert jnp.allclose(out_fb, ref_fn(x1, bias), atol=1e-5, rtol=1e-5)

    # 2) Same spec shape forced through the Pallas kernel (fused permute+linear).
    out_k = jax.block_until_ready(permute_linear(x1, w, bias, force_pallas=True))
    assert out_k.shape == (B, S, S)
    assert jnp.allclose(out_k, ref_fn(x1, bias), atol=1e-5, rtol=1e-5)

    # 3) Small batched shape exercising the batch grid (grid=(2,), parallel semantics).
    B2 = 8
    x2 = jax.random.normal(kx2, (B2, S, S), dtype=jnp.float32)
    out_b = jax.block_until_ready(
        permute_linear(x2, w, bias, force_pallas=True, batch_tile=4))
    assert jnp.allclose(out_b, ref_fn(x2, bias), atol=1e-5, rtol=1e-5)

    print("KERNEL_OK")
</pallas_src>

<mosaic_0001>
module attributes {stable_mosaic.version = 11 : i64} {
  func.func @_fused_permute_linear_kernel(%arg0: i32, %arg1: memref<1x2x2xf32, #tpu.memory_space<vmem>>, %arg2: memref<2x2xf32, #tpu.memory_space<vmem>>, %arg3: memref<1x2xf32, #tpu.memory_space<vmem>>, %arg4: memref<1x2x2xf32, #tpu.memory_space<vmem>>) attributes {dimension_semantics = [#tpu.dimension_semantics<parallel>], iteration_bounds = array<i64: 1>, scalar_prefetch = 0 : i64, scratch_operands = 0 : i64, tpu.core_type = #tpu.core_type<tc>, window_params = [{transform_indices = @transform_0, window_bounds = array<i64: 1, 2, 2>}, {pipeline_mode = #tpu.pipeline_mode<synchronous>, transform_indices = @transform_1, window_bounds = array<i64: 2, 2>}, {pipeline_mode = #tpu.pipeline_mode<synchronous>, transform_indices = @transform_2, window_bounds = array<i64: 1, 2>}, {transform_indices = @transform_3, window_bounds = array<i64: 1, 2, 2>}]} {
    %c0 = arith.constant 0 : index
    %c0_0 = arith.constant 0 : index
    %c0_1 = arith.constant 0 : index
    %0 = vector.load %arg1[%c0, %c0_0, %c0_1] : memref<1x2x2xf32, #tpu.memory_space<vmem>>, vector<1x2x2xf32>
    %c0_2 = arith.constant 0 : index
    %c0_3 = arith.constant 0 : index
    %1 = vector.load %arg2[%c0_2, %c0_3] : memref<2x2xf32, #tpu.memory_space<vmem>>, vector<2x2xf32>
    %2 = vector.shape_cast %1 : vector<2x2xf32> to vector<1x2x2xf32>
    "tpu.trace_start"() <{level = 10 : i32, message = "bjk,bki->bji"}> : () -> ()
    %cst = arith.constant dense<0.000000e+00> : vector<1x2x2xf32>
    %3 = tpu.matmul %2, %0, %cst {dimension_numbers = #tpu.dot_dimension_numbers<[2], [1], [1], [2], [0, 0, 0, 1, 1, 2], [0], [0]>} : vector<1x2x2xf32>, vector<1x2x2xf32>, vector<1x2x2xf32> -> vector<1x2x2xf32>
    "tpu.trace_stop"() : () -> ()
    %4 = tpu.transpose %3, [0, 2, 1] : vector<1x2x2xf32> -> vector<1x2x2xf32>
    %c0_4 = arith.constant 0 : index
    %c0_5 = arith.constant 0 : index
    %5 = vector.load %arg3[%c0_4, %c0_5] : memref<1x2xf32, #tpu.memory_space<vmem>>, vector<1x2xf32>
    %6 = vector.shape_cast %5 : vector<1x2xf32> to vector<1x1x2xf32>
    %7 = vector.broadcast %6 : vector<1x1x2xf32> to vector<1x2x2xf32>
    %8 = arith.addf %4, %7 : vector<1x2x2xf32>
    %c0_6 = arith.constant 0 : index
    %c0_7 = arith.constant 0 : index
    %c0_8 = arith.constant 0 : index
    %9 = vector.load %arg4[%c0_6, %c0_7, %c0_8] : memref<1x2x2xf32, #tpu.memory_space<vmem>>, vector<1x2x2xf32>
    tpu.vector_store %arg4[%c0_6, %c0_7, %c0_8], %8 {strides = array<i32>} : memref<1x2x2xf32, #tpu.memory_space<vmem>>, vector<1x2x2xf32>,
    return
  }
  func.func @transform_0(%arg0: i32) -> (i32, i32, i32) {
    %c0_i32 = arith.constant 0 : i32
    %c0_i32_0 = arith.constant 0 : i32
    %c0_i32_1 = arith.constant 0 : i32
    return %arg0, %c0_i32, %c0_i32_0 : i32, i32, i32
  }
  func.func @transform_1(%arg0: i32) -> (i32, i32) {
    %c0_i32 = arith.constant 0 : i32
    %c0_i32_0 = arith.constant 0 : i32
    %c0_i32_1 = arith.constant 0 : i32
    return %c0_i32, %c0_i32_0 : i32, i32
  }
  func.func @transform_2(%arg0: i32) -> (i32, i32) {
    %c0_i32 = arith.constant 0 : i32
    %c0_i32_0 = arith.constant 0 : i32
    %c0_i32_1 = arith.constant 0 : i32
    return %c0_i32, %c0_i32_0 : i32, i32
  }
  func.func @transform_3(%arg0: i32) -> (i32, i32, i32) {
    %c0_i32 = arith.constant 0 : i32
    %c0_i32_0 = arith.constant 0 : i32
    %c0_i32_1 = arith.constant 0 : i32
    return %arg0, %c0_i32, %c0_i32_0 : i32, i32, i32
  }
}

</mosaic_0001>

<llo_original>
// kernel: tpu_custom_call.1
$region0: #{tpu_custom_call.1}
  #allocation0 [shape = 'u32[]', space=smem, size = 0x4, offset = 0x4, fixed_abs, tag = 'smem constant byte address 0x4 - core index']
  #allocation1 [shape = 'u32[144,128]{1,0:T(1,128)}', space=vmem, size = 0x12000, scoped, tag = 'internal scratch']
  %s0 = inlined_call_operand.hbm [shape: f32[1,2,2], index: 0, kind: input, shape index: {}]
  %s1 = inlined_call_operand.vmem [shape: f32[2,2], index: 1, kind: input, shape index: {}]
  %s2 = inlined_call_operand.vmem [shape: f32[1,2], index: 2, kind: input, shape index: {}]
  %s3 = inlined_call_operand.hbm [shape: f32[1,2,2], index: 3, kind: output, shape index: {}]
  %s4 = sld [smem:[#allocation0]]
  $region26: #{tpu_custom_call.1} parent=0
    _
  %s6 = ssub.s32 1, %s4
  %s7 = scalar_select 0, %s6, %s4
  $region1: #{tpu_custom_call.1} parent=0
    #allocation2 [shape = 'u8[1024]{0}', space=vmem, size = 0x400, scoped, tag = 'input window, operand 0, single buffered']
    #allocation3 [shape = 's32[1]{0}', space=sflag, size = 0x4, scoped, tag = 'scoped memory for tpu_custom_call.1']
    #allocation4 [shape = 's32[1]{0}', space=sflag, size = 0x4, scoped, tag = 'scoped memory for tpu_custom_call.1']
    #allocation5 [shape = 'u8[1024]{0}', space=vmem, size = 0x400, scoped, tag = 'output window, operand 0, single buffered']
    %8 = vsyncpa [#allocation3], 0
    %9 = vsyncpa [#allocation4], 0
    // Predicated region
    $region2: #{tpu_custom_call.1} parent=1 // pred_check
      _
    $region3: #{tpu_custom_call.1} parent=1 // pred_check_branch
      %11 = sbr.rel (0) target = $region5
    $region4: #{tpu_custom_call.1} parent=1 // pred_region
      %s13 = ssub.s32 32, 32
      %14 = vsyncadd [#allocation3], %s13
      %s16 = sshll.u32 [#allocation2], 4
      %s17 = int_to_ptr.vmem [resolvable:$true] %s16
      %19 = dma.hbm_to_vmem [thread:$0]  %s0, 32, %s17, [#allocation3]
    $region5: #{tpu_custom_call.1} parent=1 // pred_fallthru
      _
    // Predicated region
    $region6: #{tpu_custom_call.1} parent=1 // pred_check
      _
    $region7: #{tpu_custom_call.1} parent=1 // pred_check_branch
      %21 = sbr.rel (0) target = $region9
    $region8: #{tpu_custom_call.1} parent=1 // pred_region
      _
    $region9: #{tpu_custom_call.1} parent=1 // pred_fallthru
      _
    // Predicated region
    $region10: #{tpu_custom_call.1} parent=1 // pred_check
      _
    $region11: #{tpu_custom_call.1} parent=1 // pred_check_branch
      %23 = sbr.rel (0) target = $region13
    $region12: #{tpu_custom_call.1} parent=1 // pred_region
      _
    $region13: #{tpu_custom_call.1} parent=1 // pred_fallthru
      _
    // Predicated region
    $region14: #{tpu_custom_call.1} parent=1 // pred_check
      _
    $region15: #{tpu_custom_call.1} parent=1 // pred_check_branch
      %25 = sbr.rel (0) target = $region17
    $region16: #{tpu_custom_call.1} parent=1 // pred_region
      %26 = dma.done [#allocation3], 32
    $region17: #{tpu_custom_call.1} parent=1 // pred_fallthru
      _
    %v27 = vld [vmem:[#allocation2] sm:$0x3]
    %v28 = vld [vmem:[%s1] sm:$0x3]
    %vm29 = vcmask 15360
    %v31 = vsel %vm29, %v28, 0
    %vm33 = vcmask 1041408
    %v35 = vsel %vm33, %v27, 0
    %37 = vmatprep.subr.mxu0 0.0
    %38 = vmatpush1.msra.mxu0 %v35
    %39 = vmatprep.subr.mxu0 0.0
    %40 = vmatpush1.msra.mxu0 0.0
    %41 = vmatprep.subr.mxu0 0.0
    %42 = vmatpush1.msra.mxu0 0.0
    %43 = vmatprep.subr.mxu0 0.0
    %44 = vmatpush1.msra.mxu0 0.0
    %45 = vmatprep.subr.mxu0 0.0
    %46 = vmatpush1.msra.mxu0 0.0
    %47 = vmatprep.subr.mxu0 0.0
    %48 = vmatpush1.msra.mxu0 0.0
    %49 = vmatprep.subr.mxu0 0.0
    %50 = vmatpush1.msra.mxu0 0.0
    %51 = vmatprep.subr.mxu0 0.0
    %52 = vmatpush1.msra.mxu0 0.0
    %53 = vmatprep.subr.mxu0 0.0
    %54 = vmatpush1.msra.mxu0 0.0
    %55 = vmatprep.subr.mxu0 0.0
    %56 = vmatpush1.msra.mxu0 0.0
    %57 = vmatprep.subr.mxu0 0.0
    %58 = vmatpush1.msra.mxu0 0.0
    %59 = vmatprep.subr.mxu0 0.0
    %60 = vmatpush1.msra.mxu0 0.0
    %61 = vmatprep.subr.mxu0 0.0
    %62 = vmatpush1.msra.mxu0 0.0
    %63 = vmatprep.subr.mxu0 0.0
    %64 = vmatpush1.msra.mxu0 0.0
    %65 = vmatprep.subr.mxu0 0.0
    %66 = vmatpush1.msra.mxu0 0.0
    %67 = vmatprep.subr.mxu0 0.0
    %68 = vmatpush1.msra.mxu0 0.0
    %69 = vmatprep.subr.mxu0 0.0
    %70 = vmatpush1.msra.mxu0 0.0
    %71 = vmatprep.subr.mxu0 0.0
    %72 = vmatpush1.msra.mxu0 0.0
    %73 = vmatprep.subr.mxu0 0.0
    %74 = vmatpush1.msra.mxu0 0.0
    %75 = vmatprep.subr.mxu0 0.0
    %76 = vmatpush1.msra.mxu0 0.0
    %77 = vmatprep.subr.mxu0 0.0
    %78 = vmatpush1.msra.mxu0 0.0
    %79 = vmatprep.subr.mxu0 0.0
    %80 = vmatpush1.msra.mxu0 0.0
    %81 = vmatprep.subr.mxu0 0.0
    %82 = vmatpush1.msra.mxu0 0.0
    %83 = vmatprep.subr.mxu0 0.0
    %84 = vmatpush1.msra.mxu0 0.0
    %85 = vmatprep.subr.mxu0 0.0
    %86 = vmatpush1.msra.mxu0 0.0
    %87 = vmatprep.subr.mxu0 0.0
    %88 = vmatpush1.msra.mxu0 0.0
    %89 = vmatprep.subr.mxu0 0.0
    %90 = vmatpush1.msra.mxu0 0.0
    %91 = vmatprep.subr.mxu0 0.0
    %92 = vmatpush1.msra.mxu0 0.0
    %93 = vmatprep.subr.mxu0 0.0
    %94 = vmatpush1.msra.mxu0 0.0
    %95 = vmatprep.subr.mxu0 0.0
    %96 = vmatpush1.msra.mxu0 0.0
    %97 = vmatprep.subr.mxu0 0.0
    %98 = vmatpush1.msra.mxu0 0.0
    %99 = vmatprep.subr.mxu0 0.0
    %100 = vmatpush1.msra.mxu0 0.0
    %101 = vmatprep.mubr.f32.mxu0 0.0
    %102 = vmatmul.mubr.f32.gmra.mrb[0].mxu0 %v31
    %v103 = vpop.f32.mrb[0].mxu0
    %v104 = vadd.f32 0.0, %v103
    %v105 = vpop.f32.mrb[0].mxu0
    %106 = vdwg.mxu0
    %107 = vxpose.xlu0.b32.start [1/16] %v104, 128
    %108 = vxpose.xlu0.b32.cont [2/16] 0.0, 128
    %109 = vxpose.xlu0.b32.cont [3/16] 0.0, 128
    %110 = vxpose.xlu0.b32.cont [4/16] 0.0, 128
    %111 = vxpose.xlu0.b32.cont [5/16] 0.0, 128
    %112 = vxpose.xlu0.b32.cont [6/16] 0.0, 128
    %113 = vxpose.xlu0.b32.cont [7/16] 0.0, 128
    %114 = vxpose.xlu0.b32.cont [8/16] 0.0, 128
    %115 = vxpose.xlu0.b32.cont [9/16] 0.0, 128
    %116 = vxpose.xlu0.b32.cont [10/16] 0.0, 128
    %117 = vxpose.xlu0.b32.cont [11/16] 0.0, 128
    %118 = vxpose.xlu0.b32.cont [12/16] 0.0, 128
    %119 = vxpose.xlu0.b32.cont [13/16] 0.0, 128
    %120 = vxpose.xlu0.b32.cont [14/16] 0.0, 128
    %121 = vxpose.xlu0.b32.cont [15/16] 0.0, 128
    %122 = vxpose.xlu0.b32.end [16/16] 0.0, 128
    %v123 = vpop.trf.xlu0
    %v124 = vpop.trf.xlu0
    %v125 = vpop.trf.xlu0
    %v126 = vpop.trf.xlu0
    %v127 = vpop.trf.xlu0
    %v128 = vpop.trf.xlu0
    %v129 = vpop.trf.xlu0
    %v130 = vpop.trf.xlu0
    %v131 = vpop.trf.xlu0
    %v132 = vpop.trf.xlu0
    %v133 = vpop.trf.xlu0
    %v134 = vpop.trf.xlu0
    %v135 = vpop.trf.xlu0
    %v136 = vpop.trf.xlu0
    %v137 = vpop.trf.xlu0
    %v138 = vpop.trf.xlu0
    %v139 = vld [vmem:[%s2] sm:$0x1]
    %v141 = vlaneseq
    %v142 = vshrl.u32 %v141, 7
    %v143 = vsub.s32 0, %v142
    %v144 = vrot.slane %v139, %v143
    %v146 = vadd.f32 %v123, %v144
    %vm147 = vcmask 9216
    %148 = vst.msk [vmem:[#allocation5] sm:$0x3] %vm147, %v146
    // Predicated region
    $region18: #{tpu_custom_call.1} parent=1 // pred_check
      _
    $region19: #{tpu_custom_call.1} parent=1 // pred_check_branch
      %150 = sbr.rel (0) target = $region21
    $region20: #{tpu_custom_call.1} parent=1 // pred_region
      %s152 = ssub.s32 32, 32
      %153 = vsyncadd [#allocation4], %s152
      %s155 = sshll.u32 [#allocation5], 4
      %s156 = int_to_ptr.vmem [resolvable:$true] %s155
      %158 = dma.vmem_to_hbm [thread:$0]  %s156, 32, %s3, [#allocation4]
    $region21: #{tpu_custom_call.1} parent=1 // pred_fallthru
      _
    // Predicated region
    $region22: #{tpu_custom_call.1} parent=1 // pred_check
      _
    $region23: #{tpu_custom_call.1} parent=1 // pred_check_branch
      %160 = sbr.rel (0) target = $region25
    $region24: #{tpu_custom_call.1} parent=1 // pred_region
      %161 = dma.done [#allocation4], 32
    $region25: #{tpu_custom_call.1} parent=1 // pred_fallthru
      _
    %162 = vsyncpa [#allocation3], 1
    %163 = vsyncpa [#allocation4], 1

</llo_original>
